<compile_context>
chip_gen: v7x
topology: tpu7x:2x2x1
jax: 0.10.0
libtpu: 0.0.40
codegen_flags: <defaults>
</compile_context>

<pallas_src>
import jax
import jax.numpy as jnp
from jax.experimental import pallas as pl
from jax.experimental.pallas import tpu as pltpu


def _attention_kernel(x_ref, wt_ref, cb_ref, a_ref, y_ref):
    """Fused attention forward for one bag tile.

    x_ref : (TB*N, F)   flattened bag tile (native dtype), F on lanes
    wt_ref: (F, 2*CL)   cols [0:C) = U^T, cols [CL:CL+C) = Conv1d weight^T
    cb_ref: (1, C)      Conv1d bias (f32)
    a_ref : (TB, C, N)  softmax attention weights (f32), instances lane-dense
    y_ref : (TB, C)     logits slab

    The grouped Conv1d(C, C, kernel_size=F, groups=C) applied to
    x_embed = a @ x is re-associated as
        y[b, c] = sum_n a[b, n, c] * (x[b, n, :] . cw[c, :]) + cb[c],
    so both dots share one MXU contraction over F and x_embed is never
    materialized.
    # TODO(synk): F.dropout(p=0.2) only acts in training mode; eval no-op, omitted.
    """
    TB, C, N = a_ref.shape
    CL = wt_ref.shape[1] // 2

    # One MXU contraction over F for scores and the conv dot (f32 accumulate).
    su = jnp.dot(x_ref[...], wt_ref[...],
                 preferred_element_type=jnp.float32)        # (TB*N, 2*CL)
    # Split bags back out; layout-preserving when N % 8 == 0 (su is small
    # relative to x either way).
    su3 = su.reshape(TB, N, 2 * CL)
    scores = su3[:, :, :C]                                   # lane offset 0
    xc = su3[:, :, CL:CL + C]                                # lane offset CL (128-aligned)

    # Softmax over instances (axis 1).
    m = jnp.max(scores, axis=1, keepdims=True)               # (TB, 1, C)
    e = jnp.exp(scores - m)
    s = jnp.sum(e, axis=1, keepdims=True)
    a = e * pl.reciprocal(s, approx=True)                    # EUP slot (free)

    # Lane-dense store: instances on the lane axis (small XLU transpose; the
    # wrapper then needs no post-kernel transpose pass).
    a_ref[...] = jnp.transpose(a, (0, 2, 1)).astype(a_ref.dtype)

    y = jnp.sum(a * xc, axis=1) + cb_ref[...]                # (TB, C)
    y_ref[...] = y.astype(y_ref.dtype)


def _vmem_limits():
    """Per-chip scoped-VMEM limit and per-tile budget (v7x has 64 MiB VMEM)."""
    cap = None
    try:
        cap = pltpu.get_tpu_info().vmem_capacity_bytes
    except Exception:
        cap = None
    if not cap:
        cap = 64 << 20                      # conservative (v7x-sized) fallback
    vmem_limit = min(int(cap) * 3 // 4, 100 << 20)
    tile_budget = max(8 << 20, vmem_limit // 3)
    return tile_budget, vmem_limit


def _pick_bag_tile(B, N, F, C, CL, itemsize, budget_bytes):
    """Largest bag tile that fits the VMEM budget with legal block shapes.

    Returns (TB, B_pad): TB is either B (single step, full-array blocks) or a
    multiple of 8 that divides B_pad = round_up(B, 8).
    # TODO(synk): a single bag larger than the VMEM budget would need an inner
    # tiling over N with an online (flash-style) softmax; not implemented
    # (TB bottoms out at 8 bags).
    """
    per_bag = (2 * N * F * itemsize         # x tile, double-buffered by the pipeline
               + 2 * N * 2 * CL * 4         # f32 matmul output + one live temp
               + 8 * N * C * 4              # exp/softmax temps, transposed a, out block
               + 2 * C * 4 + 256)
    cap = max(1, budget_bytes // per_bag)
    # Keep >= 2 grid steps when the batch allows it: v7x has 2 TensorCores and
    # >= 2 steps also restores DMA/compute overlap in the pipeline.
    if B >= 16:
        cap = min(cap, max(8, (B // 2 + 7) // 8 * 8))
    if B <= cap:
        return B, B                         # whole batch in one step
    b_pad = ((B + 7) // 8) * 8              # pad so an 8-aligned tile exists
    tb = max(8, (min(cap, b_pad) // 8) * 8)
    while b_pad % tb:
        tb -= 8
    return tb, b_pad


def attention_forward(x, u_weight, conv_weight, conv_bias):
    """x: (B, N, F); u_weight: (C, F); conv_weight: (C, 1, F); conv_bias: (C,)."""
    B, N, F = x.shape
    C = u_weight.shape[0]
    CL = max(128, ((C + 127) // 128) * 128)        # lane-aligned class padding
    itemsize = jnp.dtype(x.dtype).itemsize

    # Stacked, transposed, lane-aligned weights: one MXU contraction serves both
    # the attention scores (lanes [0:C)) and the conv dot (lanes [CL:CL+C)).
    wT = jnp.zeros((F, 2 * CL), dtype=x.dtype)
    wT = wT.at[:, :C].set(u_weight.reshape(C, F).T.astype(x.dtype))
    wT = wT.at[:, CL:CL + C].set(conv_weight.reshape(C, F).T.astype(x.dtype))
    cb = conv_bias.reshape(1, C).astype(jnp.float32)

    tile_budget, vmem_limit = _vmem_limits()
    budget = max(4 << 20, tile_budget - 2 * F * 2 * CL * itemsize)
    TB, B_pad = _pick_bag_tile(B, N, F, C, CL, itemsize, budget)

    xr = x if B_pad == B else jnp.pad(x, ((0, B_pad - B), (0, 0), (0, 0)))
    x2 = xr.reshape(B_pad * N, F)                  # free (row-major) view in HBM

    grid = (B_pad // TB,)

    a_pad, y_pad = pl.pallas_call(
        _attention_kernel,
        out_shape=(
            jax.ShapeDtypeStruct((B_pad, C, N), jnp.float32),   # attention map
            jax.ShapeDtypeStruct((B_pad, C), x.dtype),          # logits slab
        ),
        grid_spec=pltpu.PrefetchScalarGridSpec(
            num_scalar_prefetch=0,
            grid=grid,
            in_specs=[
                pl.BlockSpec((TB * N, F), lambda b: (b, 0)),    # flat bag tile
                pl.BlockSpec((F, 2 * CL), lambda b: (0, 0)),    # stacked weights
                pl.BlockSpec((1, C), lambda b: (0, 0)),         # conv bias
            ],
            out_specs=[
                pl.BlockSpec((TB, C, N), lambda b: (b, 0, 0)),  # lane-dense a
                pl.BlockSpec((TB, C), lambda b: (b, 0)),
            ],
        ),
        compiler_params=pltpu.CompilerParams(
            dimension_semantics=("parallel",),    # bag tiles are independent
            vmem_limit_bytes=vmem_limit,
        ),
    )(x2, wT, cb)

    a = a_pad if B_pad == B else a_pad[:B]
    y2 = y_pad if B_pad == B else y_pad[:B]
    # classifier(...).squeeze(-1).squeeze(-1): length-1 conv axis already gone;
    # drop C only when n_classes == 1.
    y = y2[:, 0] if C == 1 else y2
    return y, a


if __name__ == "__main__":
    key = jax.random.PRNGKey(0)

    def run_case(B, N, F, C, case_key):
        k_x, k_u, k_cw, k_cb = jax.random.split(case_key, 4)
        x = jax.random.normal(k_x, (B, N, F), dtype=jnp.float32)
        # Deterministic parameter init (PyTorch-style uniform bounds, fan_in = F).
        bound = 1.0 / (F ** 0.5)
        u_weight = jax.random.uniform(k_u, (C, F), jnp.float32, -bound, bound)
        conv_weight = jax.random.uniform(k_cw, (C, 1, F), jnp.float32, -bound, bound)
        conv_bias = jax.random.uniform(k_cb, (C,), jnp.float32, -bound, bound)

        y_logits, a = attention_forward(x, u_weight, conv_weight, conv_bias)
        jax.block_until_ready((y_logits, a))

        # Pure-JAX reference (same math as the PyTorch module in eval mode).
        scores_ref = jnp.einsum("cf,bnf->bcn", u_weight, x)
        a_ref = jax.nn.softmax(scores_ref, axis=-1)
        x_embed_ref = jnp.einsum("bcn,bnf->bcf", a_ref, x)
        y_ref = jnp.sum(x_embed_ref * conv_weight.reshape(C, F)[None], axis=-1) + conv_bias
        y_ref = y_ref[:, 0] if C == 1 else y_ref

        assert y_logits.shape == ((B,) if C == 1 else (B, C))
        assert a.shape == (B, C, N)
        # approx=True EUP reciprocal in the softmax -> compare at 1e-3.
        assert jnp.allclose(a, a_ref, rtol=1e-3, atol=1e-3), f"attention mismatch (C={C})"
        assert jnp.allclose(y_logits, y_ref, rtol=1e-3, atol=2e-3), f"logits mismatch (C={C})"

    k1, k2 = jax.random.split(key)
    run_case(B=2, N=8, F=32, C=1, case_key=k1)   # module default n_classes=1
    run_case(B=2, N=8, F=32, C=3, case_key=k2)   # multi-class path
    print("KERNEL_OK")
</pallas_src>

<mosaic_0001>
module attributes {stable_mosaic.version = 11 : i64} {
  func.func @_attention_kernel(%arg0: i32, %arg1: memref<16x32xf32, #tpu.memory_space<vmem>>, %arg2: memref<32x256xf32, #tpu.memory_space<vmem>>, %arg3: memref<1x1xf32, #tpu.memory_space<vmem>>, %arg4: memref<2x1x8xf32, #tpu.memory_space<vmem>>, %arg5: memref<2x1xf32, #tpu.memory_space<vmem>>) attributes {dimension_semantics = [#tpu.dimension_semantics<parallel>], iteration_bounds = array<i64: 1>, scalar_prefetch = 0 : i64, scratch_operands = 0 : i64, tpu.core_type = #tpu.core_type<tc>, window_params = [{transform_indices = @transform_0, window_bounds = array<i64: 16, 32>}, {pipeline_mode = #tpu.pipeline_mode<synchronous>, transform_indices = @transform_1, window_bounds = array<i64: 32, 256>}, {pipeline_mode = #tpu.pipeline_mode<synchronous>, transform_indices = @transform_2, window_bounds = array<i64: 1, 1>}, {transform_indices = @transform_3, window_bounds = array<i64: 2, 1, 8>}, {transform_indices = @transform_4, window_bounds = array<i64: 2, 1>}]} {
    %c0 = arith.constant 0 : index
    %c0_0 = arith.constant 0 : index
    %0 = vector.load %arg1[%c0, %c0_0] : memref<16x32xf32, #tpu.memory_space<vmem>>, vector<16x32xf32>
    %c0_1 = arith.constant 0 : index
    %c0_2 = arith.constant 0 : index
    %1 = vector.load %arg2[%c0_1, %c0_2] : memref<32x256xf32, #tpu.memory_space<vmem>>, vector<32x256xf32>
    %cst = arith.constant dense<0.000000e+00> : vector<16x256xf32>
    %2 = tpu.matmul %0, %1, %cst {dimension_numbers = #tpu.dot_dimension_numbers<[1], [0], [0], [1], [0, 0, 1, 1], [], []>} : vector<16x32xf32>, vector<32x256xf32>, vector<16x256xf32> -> vector<16x256xf32>
    %3 = vector.shape_cast %2 : vector<16x256xf32> to vector<2x8x256xf32>
    %4 = vector.extract_strided_slice %3 {offsets = [0, 0, 0], sizes = [2, 8, 1], strides = [1, 1, 1]} : vector<2x8x256xf32> to vector<2x8x1xf32>
    %5 = vector.extract_strided_slice %3 {offsets = [0, 0, 128], sizes = [2, 8, 1], strides = [1, 1, 1]} : vector<2x8x256xf32> to vector<2x8x1xf32>
    %cst_3 = arith.constant dense<0xFF800000> : vector<2x1xf32>
    %6 = vector.multi_reduction <maximumf>, %4, %cst_3 [1] : vector<2x8x1xf32> to vector<2x1xf32>
    %7 = vector.shape_cast %6 : vector<2x1xf32> to vector<2x1x1xf32>
    %8 = vector.broadcast %7 : vector<2x1x1xf32> to vector<2x8x1xf32>
    %9 = arith.subf %4, %8 : vector<2x8x1xf32>
    %10 = math.exp %9 : vector<2x8x1xf32>
    %cst_4 = arith.constant dense<0.000000e+00> : vector<2x1xf32>
    %11 = vector.multi_reduction <add>, %10, %cst_4 [1] : vector<2x8x1xf32> to vector<2x1xf32>
    %12 = vector.shape_cast %11 : vector<2x1xf32> to vector<2x1x1xf32>
    %13 = tpu.reciprocal %12 {approx = true} : vector<2x1x1xf32> -> vector<2x1x1xf32>
    %14 = vector.broadcast %13 : vector<2x1x1xf32> to vector<2x8x1xf32>
    %15 = arith.mulf %10, %14 : vector<2x8x1xf32>
    %16 = tpu.transpose %15, [0, 2, 1] : vector<2x8x1xf32> -> vector<2x1x8xf32>
    %c0_5 = arith.constant 0 : index
    %c0_6 = arith.constant 0 : index
    %c0_7 = arith.constant 0 : index
    %17 = vector.load %arg4[%c0_5, %c0_6, %c0_7] : memref<2x1x8xf32, #tpu.memory_space<vmem>>, vector<2x1x8xf32>
    tpu.vector_store %arg4[%c0_5, %c0_6, %c0_7], %16 {strides = array<i32>} : memref<2x1x8xf32, #tpu.memory_space<vmem>>, vector<2x1x8xf32>,
    %18 = arith.mulf %15, %5 : vector<2x8x1xf32>
    %cst_8 = arith.constant dense<0.000000e+00> : vector<2x1xf32>
    %19 = vector.multi_reduction <add>, %18, %cst_8 [1] : vector<2x8x1xf32> to vector<2x1xf32>
    %c0_9 = arith.constant 0 : index
    %c0_10 = arith.constant 0 : index
    %20 = vector.load %arg3[%c0_9, %c0_10] : memref<1x1xf32, #tpu.memory_space<vmem>>, vector<1x1xf32>
    %21 = vector.broadcast %20 : vector<1x1xf32> to vector<2x1xf32>
    %22 = arith.addf %19, %21 : vector<2x1xf32>
    %c0_11 = arith.constant 0 : index
    %c0_12 = arith.constant 0 : index
    %23 = vector.load %arg5[%c0_11, %c0_12] : memref<2x1xf32, #tpu.memory_space<vmem>>, vector<2x1xf32>
    tpu.vector_store %arg5[%c0_11, %c0_12], %22 {strides = array<i32>} : memref<2x1xf32, #tpu.memory_space<vmem>>, vector<2x1xf32>,
    return
  }
  func.func @transform_0(%arg0: i32) -> (i32, i32) {
    %c0_i32 = arith.constant 0 : i32
    %c0_i32_0 = arith.constant 0 : i32
    return %arg0, %c0_i32 : i32, i32
  }
  func.func @transform_1(%arg0: i32) -> (i32, i32) {
    %c0_i32 = arith.constant 0 : i32
    %c0_i32_0 = arith.constant 0 : i32
    %c0_i32_1 = arith.constant 0 : i32
    return %c0_i32, %c0_i32_0 : i32, i32
  }
  func.func @transform_2(%arg0: i32) -> (i32, i32) {
    %c0_i32 = arith.constant 0 : i32
    %c0_i32_0 = arith.constant 0 : i32
    %c0_i32_1 = arith.constant 0 : i32
    return %c0_i32, %c0_i32_0 : i32, i32
  }
  func.func @transform_3(%arg0: i32) -> (i32, i32, i32) {
    %c0_i32 = arith.constant 0 : i32
    %c0_i32_0 = arith.constant 0 : i32
    %c0_i32_1 = arith.constant 0 : i32
    return %arg0, %c0_i32, %c0_i32_0 : i32, i32, i32
  }
  func.func @transform_4(%arg0: i32) -> (i32, i32) {
    %c0_i32 = arith.constant 0 : i32
    %c0_i32_0 = arith.constant 0 : i32
    return %arg0, %c0_i32 : i32, i32
  }
}

</mosaic_0001>

<llo_original>
// kernel: tpu_custom_call.1
$region0: #{tpu_custom_call.1}
  #allocation0 [shape = 'u32[]', space=smem, size = 0x4, offset = 0x4, fixed_abs, tag = 'smem constant byte address 0x4 - core index']
  #allocation1 [shape = 'u32[144,128]{1,0:T(1,128)}', space=vmem, size = 0x12000, scoped, tag = 'internal scratch']
  #allocation2 [shape = 'f32[1,1]{1,0:T(1,128)S(1)}', space=vmem, size = 0x200, scoped, tag = 'scoped memory for tpu_custom_call.1']
  %s0 = inlined_call_operand.hbm [shape: f32[16,32], index: 0, kind: input, shape index: {}]
  %s1 = inlined_call_operand.hbm [shape: f32[32,256], index: 1, kind: input, shape index: {}]
  %s2 = inlined_call_operand.<no memory space> [shape: f32[1,1], index: 2, kind: input, shape index: {}]
  %s3 = inlined_call_operand.hbm [shape: f32[2,1,8], index: 3, kind: output, shape index: {0}]
  %s4 = inlined_call_operand.vmem [shape: f32[2,1], index: 4, kind: output, shape index: {1}]
  %5 = xla_tuple %s3, %s4
  %s6 = sld [smem:[#allocation0]]
  $region38: #{tpu_custom_call.1} parent=0
    _
  %s8 = ssub.s32 1, %s6
  %s9 = scalar_select 0, %s8, %s6
  %v10 = vstv %s2
  %11 = vst [vmem:[#allocation2] sm:$0x1] %v10
  $region1: #{tpu_custom_call.1} parent=0
    #allocation3 [shape = 'u8[8192]{0}', space=vmem, size = 0x2000, scoped, tag = 'input window, operand 0, single buffered']
    #allocation4 [shape = 's32[1]{0}', space=sflag, size = 0x4, scoped, tag = 'scoped memory for tpu_custom_call.1']
    #allocation5 [shape = 's32[1]{0}', space=sflag, size = 0x4, scoped, tag = 'scoped memory for tpu_custom_call.1']
    #allocation6 [shape = 'u8[32768]{0}', space=vmem, size = 0x8000, scoped, tag = 'input window, operand 1, single buffered']
    #allocation7 [shape = 's32[1]{0}', space=sflag, size = 0x4, scoped, tag = 'scoped memory for tpu_custom_call.1']
    #allocation8 [shape = 'u8[1024]{0}', space=vmem, size = 0x400, scoped, tag = 'output window, operand 0, single buffered']
    %12 = vsyncpa [#allocation4], 0
    %13 = vsyncpa [#allocation7], 0
    %14 = vsyncpa [#allocation5], 0
    // Predicated region
    $region2: #{tpu_custom_call.1} parent=1 // pred_check
      _
    $region3: #{tpu_custom_call.1} parent=1 // pred_check_branch
      %16 = sbr.rel (0) target = $region5
    $region4: #{tpu_custom_call.1} parent=1 // pred_region
      %s18 = ssub.s32 256, 256
      %19 = vsyncadd [#allocation4], %s18
      %s20 = sshll.u32 [#allocation3], 4
      %s21 = int_to_ptr.vmem [resolvable:$true] %s20
      %26 = dma.hbm_to_vmem [thread:$0]  %s0, 256, %s21, [#allocation4], 128, 128, 8
    $region5: #{tpu_custom_call.1} parent=1 // pred_fallthru
      _
    // Predicated region
    $region6: #{tpu_custom_call.1} parent=1 // pred_check
      _
    $region7: #{tpu_custom_call.1} parent=1 // pred_check_branch
      %28 = sbr.rel (0) target = $region9
    $region8: #{tpu_custom_call.1} parent=1 // pred_region
      %s30 = ssub.s32 1024, 1024
      %31 = vsyncadd [#allocation7], %s30
      %s32 = sshll.u32 [#allocation6], 4
      %s33 = int_to_ptr.vmem [resolvable:$true] %s32
      %38 = dma.hbm_to_vmem [thread:$0]  %s1, 1024, %s33, [#allocation7], 256, 256, 16
    $region9: #{tpu_custom_call.1} parent=1 // pred_fallthru
      _
    // Predicated region
    $region10: #{tpu_custom_call.1} parent=1 // pred_check
      _
    $region11: #{tpu_custom_call.1} parent=1 // pred_check_branch
      %40 = sbr.rel (0) target = $region13
    $region12: #{tpu_custom_call.1} parent=1 // pred_region
      _
    $region13: #{tpu_custom_call.1} parent=1 // pred_fallthru
      _
    // Predicated region
    $region14: #{tpu_custom_call.1} parent=1 // pred_check
      _
    $region15: #{tpu_custom_call.1} parent=1 // pred_check_branch
      %42 = sbr.rel (0) target = $region17
    $region16: #{tpu_custom_call.1} parent=1 // pred_region
      %43 = dma.done [#allocation4], 256
    $region17: #{tpu_custom_call.1} parent=1 // pred_fallthru
      _
    // Predicated region
    $region18: #{tpu_custom_call.1} parent=1 // pred_check
      _
    $region19: #{tpu_custom_call.1} parent=1 // pred_check_branch
      %45 = sbr.rel (0) target = $region21
    $region20: #{tpu_custom_call.1} parent=1 // pred_region
      %46 = dma.done [#allocation7], 1024
    $region21: #{tpu_custom_call.1} parent=1 // pred_fallthru
      _
    %v47 = vld [vmem:[#allocation3] sm:$0xff]
    %v48 = vld [vmem:[#allocation3 + $0x8] sm:$0xff]
    %v49 = vld [vmem:[#allocation6] sm:$0xff]
    %v50 = vld [vmem:[#allocation6 + $0x8] sm:$0xff]
    %v51 = vld [vmem:[#allocation6 + $0x10] sm:$0xff]
    %v52 = vld [vmem:[#allocation6 + $0x18] sm:$0xff]
    %v53 = vld [vmem:[#allocation6 + $0x20] sm:$0xff]
    %v54 = vld [vmem:[#allocation6 + $0x28] sm:$0xff]
    %v55 = vld [vmem:[#allocation6 + $0x30] sm:$0xff]
    %v56 = vld [vmem:[#allocation6 + $0x38] sm:$0xff]
    %vm57 = vcmask 261120
    %v59 = vsel %vm57, %v47, 0
    %v62 = vsel %vm57, %v48, 0
    %64 = vmatprep.subr.mxu0 %v50
    %65 = vmatpush1.msra.mxu0 %v49
    %66 = vmatprep.subr.mxu0 %v52
    %67 = vmatpush1.msra.mxu0 %v51
    %68 = vmatprep.subr.mxu0 %v54
    %69 = vmatpush1.msra.mxu0 %v53
    %70 = vmatprep.subr.mxu0 %v56
    %71 = vmatpush1.msra.mxu0 %v55
    %72 = vmatprep.subr.mxu0 0.0
    %73 = vmatpush1.msra.mxu0 0.0
    %74 = vmatprep.subr.mxu0 0.0
    %75 = vmatpush1.msra.mxu0 0.0
    %76 = vmatprep.subr.mxu0 0.0
    %77 = vmatpush1.msra.mxu0 0.0
    %78 = vmatprep.subr.mxu0 0.0
    %79 = vmatpush1.msra.mxu0 0.0
    %80 = vmatprep.subr.mxu0 0.0
    %81 = vmatpush1.msra.mxu0 0.0
    %82 = vmatprep.subr.mxu0 0.0
    %83 = vmatpush1.msra.mxu0 0.0
    %84 = vmatprep.subr.mxu0 0.0
    %85 = vmatpush1.msra.mxu0 0.0
    %86 = vmatprep.subr.mxu0 0.0
    %87 = vmatpush1.msra.mxu0 0.0
    %88 = vmatprep.subr.mxu0 0.0
    %89 = vmatpush1.msra.mxu0 0.0
    %90 = vmatprep.subr.mxu0 0.0
    %91 = vmatpush1.msra.mxu0 0.0
    %92 = vmatprep.subr.mxu0 0.0
    %93 = vmatpush1.msra.mxu0 0.0
    %94 = vmatprep.subr.mxu0 0.0
    %95 = vmatpush1.msra.mxu0 0.0
    %96 = vmatprep.subr.mxu0 0.0
    %97 = vmatpush1.msra.mxu0 0.0
    %98 = vmatprep.subr.mxu0 0.0
    %99 = vmatpush1.msra.mxu0 0.0
    %100 = vmatprep.subr.mxu0 0.0
    %101 = vmatpush1.msra.mxu0 0.0
    %102 = vmatprep.subr.mxu0 0.0
    %103 = vmatpush1.msra.mxu0 0.0
    %104 = vmatprep.subr.mxu0 0.0
    %105 = vmatpush1.msra.mxu0 0.0
    %106 = vmatprep.subr.mxu0 0.0
    %107 = vmatpush1.msra.mxu0 0.0
    %108 = vmatprep.subr.mxu0 0.0
    %109 = vmatpush1.msra.mxu0 0.0
    %110 = vmatprep.subr.mxu0 0.0
    %111 = vmatpush1.msra.mxu0 0.0
    %112 = vmatprep.subr.mxu0 0.0
    %113 = vmatpush1.msra.mxu0 0.0
    %114 = vmatprep.subr.mxu0 0.0
    %115 = vmatpush1.msra.mxu0 0.0
    %116 = vmatprep.subr.mxu0 0.0
    %117 = vmatpush1.msra.mxu0 0.0
    %118 = vmatprep.subr.mxu0 0.0
    %119 = vmatpush1.msra.mxu0 0.0
    %120 = vmatprep.subr.mxu0 0.0
    %121 = vmatpush1.msra.mxu0 0.0
    %122 = vmatprep.subr.mxu0 0.0
    %123 = vmatpush1.msra.mxu0 0.0
    %124 = vmatprep.subr.mxu0 0.0
    %125 = vmatpush1.msra.mxu0 0.0
    %126 = vmatprep.subr.mxu0 0.0
    %127 = vmatpush1.msra.mxu0 0.0
    %128 = vmatprep.mubr.f32.mxu0 0.0
    %129 = vmatmul.mubr.f32.gmra.mrb[0].mxu0 %v59
    %v130 = vpop.f32.mrb[0].mxu0
    %v131 = vadd.f32 0.0, %v130
    %v132 = vpop.f32.mrb[0].mxu0
    %v133 = vadd.f32 0.0, %v132
    %134 = vmatprep.mubr.f32.mxu0 0.0
    %135 = vmatmul.mubr.f32.gmra.mrb[0].mxu0 %v62
    %v136 = vpop.f32.mrb[0].mxu0
    %v137 = vadd.f32 0.0, %v136
    %v138 = vpop.f32.mrb[0].mxu0
    %v139 = vadd.f32 0.0, %v138
    %140 = vdwg.mxu0
    %vm141 = vcmask 7168
    %v142 = vsel %vm141, %v131, -inf
    %v143 = vrot.slane %v142, 4
    %v144 = vmax.f32 %v142, %v143
    %v145 = vrot.slane %v144, 2
    %v146 = vmax.f32 %v144, %v145
    %v147 = vrot.slane %v146, 1
    %v148 = vmax.f32 %v146, %v147
    %v149 = vsel %vm141, %v137, -inf
    %v150 = vrot.slane %v149, 4
    %v151 = vmax.f32 %v149, %v150
    %v152 = vrot.slane %v151, 2
    %v153 = vmax.f32 %v151, %v152
    %v154 = vrot.slane %v153, 1
    %v155 = vmax.f32 %v153, %v154
    %v156 = vsub.f32 %v131, %v148
    %v157 = vsub.f32 %v137, %v155
    %v158 = vmul.f32 %v156, 1.442695
    %v159 = vpow.pop %v158
    %v160 = vmul.f32 %v157, 1.442695
    %v161 = vpow.pop %v160
    %v162 = vsel %vm141, %v159, 0.0
    %v163 = vrot.slane %v162, 4
    %v164 = vadd.f32 %v162, %v163
    %v165 = vrot.slane %v164, 2
    %v166 = vadd.f32 %v164, %v165
    %v167 = vrot.slane %v166, 1
    %v168 = vadd.f32 %v166, %v167
    %v169 = vsel %vm141, %v161, 0.0
    %v170 = vrot.slane %v169, 4
    %v171 = vadd.f32 %v169, %v170
    %v172 = vrot.slane %v171, 2
    %v173 = vadd.f32 %v171, %v172
    %v174 = vrot.slane %v173, 1
    %v175 = vadd.f32 %v173, %v174
    %v176 = vrcp.pop %v168
    %v177 = vrcp.pop %v175
    %v178 = vmul.f32 %v159, %v176
    %v179 = vmul.f32 %v161, %v177
    %180 = vxpose.xlu0.b32.start [1/16] %v178, 128
    %181 = vxpose.xlu0.b32.cont [2/16] 0.0, 128
    %182 = vxpose.xlu0.b32.cont [3/16] 0.0, 128
    %183 = vxpose.xlu0.b32.cont [4/16] 0.0, 128
    %184 = vxpose.xlu0.b32.cont [5/16] 0.0, 128
    %185 = vxpose.xlu0.b32.cont [6/16] 0.0, 128
    %186 = vxpose.xlu0.b32.cont [7/16] 0.0, 128
    %187 = vxpose.xlu0.b32.cont [8/16] 0.0, 128
    %188 = vxpose.xlu0.b32.cont [9/16] 0.0, 128
    %189 = vxpose.xlu0.b32.cont [10/16] 0.0, 128
    %190 = vxpose.xlu0.b32.cont [11/16] 0.0, 128
    %191 = vxpose.xlu0.b32.cont [12/16] 0.0, 128
    %192 = vxpose.xlu0.b32.cont [13/16] 0.0, 128
    %193 = vxpose.xlu0.b32.cont [14/16] 0.0, 128
    %194 = vxpose.xlu0.b32.cont [15/16] 0.0, 128
    %195 = vxpose.xlu0.b32.end [16/16] 0.0, 128
    %v196 = vpop.trf.xlu0
    %v197 = vpop.trf.xlu0
    %v198 = vpop.trf.xlu0
    %v199 = vpop.trf.xlu0
    %v200 = vpop.trf.xlu0
    %v201 = vpop.trf.xlu0
    %v202 = vpop.trf.xlu0
    %v203 = vpop.trf.xlu0
    %v204 = vpop.trf.xlu0
    %v205 = vpop.trf.xlu0
    %v206 = vpop.trf.xlu0
    %v207 = vpop.trf.xlu0
    %v208 = vpop.trf.xlu0
    %v209 = vpop.trf.xlu0
    %v210 = vpop.trf.xlu0
    %v211 = vpop.trf.xlu0
    %212 = vxpose.xlu0.b32.start [1/16] %v179, 128
    %213 = vxpose.xlu0.b32.cont [2/16] 0.0, 128
    %214 = vxpose.xlu0.b32.cont [3/16] 0.0, 128
    %215 = vxpose.xlu0.b32.cont [4/16] 0.0, 128
    %216 = vxpose.xlu0.b32.cont [5/16] 0.0, 128
    %217 = vxpose.xlu0.b32.cont [6/16] 0.0, 128
    %218 = vxpose.xlu0.b32.cont [7/16] 0.0, 128
    %219 = vxpose.xlu0.b32.cont [8/16] 0.0, 128
    %220 = vxpose.xlu0.b32.cont [9/16] 0.0, 128
    %221 = vxpose.xlu0.b32.cont [10/16] 0.0, 128
    %222 = vxpose.xlu0.b32.cont [11/16] 0.0, 128
    %223 = vxpose.xlu0.b32.cont [12/16] 0.0, 128
    %224 = vxpose.xlu0.b32.cont [13/16] 0.0, 128
    %225 = vxpose.xlu0.b32.cont [14/16] 0.0, 128
    %226 = vxpose.xlu0.b32.cont [15/16] 0.0, 128
    %227 = vxpose.xlu0.b32.end [16/16] 0.0, 128
    %v228 = vpop.trf.xlu0
    %v229 = vpop.trf.xlu0
    %v230 = vpop.trf.xlu0
    %v231 = vpop.trf.xlu0
    %v232 = vpop.trf.xlu0
    %v233 = vpop.trf.xlu0
    %v234 = vpop.trf.xlu0
    %v235 = vpop.trf.xlu0
    %v236 = vpop.trf.xlu0
    %v237 = vpop.trf.xlu0
    %v238 = vpop.trf.xlu0
    %v239 = vpop.trf.xlu0
    %v240 = vpop.trf.xlu0
    %v241 = vpop.trf.xlu0
    %v242 = vpop.trf.xlu0
    %v243 = vpop.trf.xlu0
    %vm244 = vcmask 57344
    %245 = vst.msk [vmem:[#allocation8] sm:$0x1] %vm244, %v196
    %246 = vst.msk [vmem:[#allocation8 + $0x1] sm:$0x1] %vm244, %v228
    %v247 = vmul.f32 %v178, %v133
    %v248 = vmul.f32 %v179, %v139
    %v249 = vsel %vm141, %v247, 0.0
    %v250 = vrot.slane %v249, 4
    %v251 = vadd.f32 %v249, %v250
    %v252 = vrot.slane %v251, 2
    %v253 = vadd.f32 %v251, %v252
    %v254 = vrot.slane %v253, 1
    %v255 = vadd.f32 %v253, %v254
    %v256 = vsel %vm141, %v248, 0.0
    %v257 = vrot.slane %v256, 4
    %v258 = vadd.f32 %v256, %v257
    %v259 = vrot.slane %v258, 2
    %v260 = vadd.f32 %v258, %v259
    %v261 = vrot.slane %v260, 1
    %v262 = vadd.f32 %v260, %v261
    %v263 = vld [vmem:[#allocation2] sm:$0x1]
    %v265 = vlaneseq
    %v266 = vshrl.u32 %v265, 7
    %v267 = vsub.s32 0, %v266
    %v268 = vrot.slane %v263, %v267
    %v270 = vadd.f32 %v255, %v268
    %v271 = vadd.f32 %v262, %v268
    %v274 = vrot.slane %v271, 7
    %vm275 = vcmask 1041409
    %v276 = vsel %vm275, %v274, %v270
    %vm278 = vcmask 1024
    %279 = vst.msk [vmem:[%s4] sm:$0x3] %vm278, %v276
    // Predicated region
    $region22: #{tpu_custom_call.1} parent=1 // pred_check
      _
    $region23: #{tpu_custom_call.1} parent=1 // pred_check_branch
      %281 = sbr.rel (0) target = $region25
    $region24: #{tpu_custom_call.1} parent=1 // pred_region
      %s283 = ssub.s32 32, 32
      %284 = vsyncadd [#allocation5], %s283
      %s285 = sshll.u32 [#allocation8], 4
      %s286 = int_to_ptr.vmem [resolvable:$true] %s285
      %291 = dma.vmem_to_hbm [thread:$0]  %s286, 32, %s3, [#allocation5], 16, 16, 1
    $region25: #{tpu_custom_call.1} parent=1 // pred_fallthru
      _
    // Predicated region
    $region26: #{tpu_custom_call.1} parent=1 // pred_check
      _
    $region27: #{tpu_custom_call.1} parent=1 // pred_check_branch
      %293 = sbr.rel (0) target = $region29
    $region28: #{tpu_custom_call.1} parent=1 // pred_region
      _
    $region29: #{tpu_custom_call.1} parent=1 // pred_fallthru
      _
    // Predicated region
    $region30: #{tpu_custom_call.1} parent=1 // pred_check
      _
    $region31: #{tpu_custom_call.1} parent=1 // pred_check_branch
      %295 = sbr.rel (0) target = $region33
    $region32: #{tpu_custom_call.1} parent=1 // pred_region
      %296 = dma.done [#allocation5], 32
    $region33: #{tpu_custom_call.1} parent=1 // pred_fallthru
      _
    // Predicated region
    $region34: #{tpu_custom_call.1} parent=1 // pred_check
      _
    $region35: #{tpu_custom_call.1} parent=1 // pred_check_branch
      %298 = sbr.rel (0) target = $region37
    $region36: #{tpu_custom_call.1} parent=1 // pred_region
      _
    $region37: #{tpu_custom_call.1} parent=1 // pred_fallthru
      _
    %299 = vsyncpa [#allocation4], 1
    %300 = vsyncpa [#allocation7], 1
    %301 = vsyncpa [#allocation5], 1

</llo_original>
